<compile_context>
chip_gen: v7x
topology: tpu7x:2x2x1
jax: 0.10.0
libtpu: 0.0.40
codegen_flags: <defaults>
</compile_context>

<pallas_src>
import functools

import jax
import jax.numpy as jnp
from jax.experimental import pallas as pl
from jax.experimental.pallas import tpu as pltpu


def _round_up(x, m):
    return (x + m - 1) // m * m


def _ce2d_kernel(x_ref, t_ref, loss_ref, cnt_ref, *, ignore_index,
                 mask_hit_with_valid):
    # x_ref: (C, TILE_N) logits in their source dtype
    #        (classes on sublanes, samples on the 128-wide lane axis)
    # t_ref: (1, TILE_N) int32 targets
    # loss_ref: (1, 1) f32 partial loss sum; cnt_ref: (1, 1) int32 valid count
    x = x_ref[...]                                    # stay in source dtype
    t = t_ref[...]                                    # (1, T) int32

    # numerically stable log-sum-exp along the class (sublane) axis
    m = jnp.max(x, axis=0, keepdims=True)             # (1, T) source dtype
    p = jnp.exp(x - m)                                # (C, T) source dtype
    sumexp = jnp.sum(p.astype(jnp.float32), axis=0, keepdims=True)  # f32 acc
    lse = jnp.log(sumexp)                             # (1, T) f32

    valid = t != ignore_index                         # (1, T) bool

    # selected logit x[target] per lane; at most one hit per lane so the
    # reduce is exact even in bf16.  Garbage lanes of a ragged last block have
    # target == ignore_index, so they never hit and are masked below anyway.
    cls_ids = jax.lax.broadcasted_iota(jnp.int32, x.shape, 0)
    hit = cls_ids == t
    if mask_hit_with_valid:                           # only if ignore_index < C
        hit = hit & valid
    sel = jnp.sum(jnp.where(hit, x, 0), axis=0, keepdims=True).astype(jnp.float32)

    # -log p[target] = lse + m - x[target]; ignored / padded lanes contribute 0
    loss_lane = jnp.where(valid, lse + m.astype(jnp.float32) - sel, 0.0)

    loss_ref[...] = jnp.sum(loss_lane, axis=1, keepdims=True)
    cnt_ref[...] = jnp.sum(valid.astype(jnp.int32), axis=1, keepdims=True)


def cross_entropy_loss_2d(inputs, targets, ignore_index=255, tile_n=32768,
                          class_major=False):
    """CrossEntropyLoss2d forward.

    inputs:  (N, C, 1, 1) or (N, C) logits (source dtype is kept end-to-end),
             or (C, N) when class_major=True (skips the transpose copy).
    targets: (N,) int class ids; entries == ignore_index are excluded from
             both the loss sum and the mean denominator.

    Returns the mean NLL over non-ignored samples; an all-ignored batch gives
    0/0 = NaN (matches PyTorch NLLLoss mean reduction).  Targets >= C that are
    not ignore_index are undefined behaviour in PyTorch; here they contribute
    zero loss but are still counted as valid.
    """
    if class_major:
        C, N = int(inputs.shape[0]), int(inputs.shape[1])
        xt = inputs.reshape(C, N)                   # already lane-dense, no copy
    else:
        N, C = int(inputs.shape[0]), int(inputs.shape[1])
        # Lane-dense layout: samples -> lanes, classes -> sublanes.  One XLA
        # copy pass; producers that can emit (C, N) should use class_major=True.
        xt = inputs.reshape(N, C).T                 # (C, N), source dtype kept

    t = targets.reshape(N).astype(jnp.int32)

    # VMEM budget: double-buffered (C_pad, tile_n) input block plus ~3 live
    # (C_pad, tile_n) f32-sized temporaries must fit the smallest default
    # scoped VMEM (16 MiB on v5e; v7x has only 64 MiB physical per core).
    c_pad = _round_up(C, 8)
    itemsize = xt.dtype.itemsize
    per_col = c_pad * (2 * itemsize + 3 * 4) + 64
    cap = max(128, ((14 << 20) // per_col) // 128 * 128)
    tile_n = max(128, min((int(tile_n) // 128) * 128, cap, _round_up(N, 128)))

    num_tiles = -(-N // tile_n)
    n_pad = num_tiles * tile_n
    # Only the (tiny) target vector is padded; the logits are NOT padded, the
    # ragged last block's undefined lanes are neutralized by ignore_index.
    if n_pad != N:
        t = jnp.pad(t, (0, n_pad - N), constant_values=ignore_index)
    t2 = t.reshape(1, n_pad)

    kernel = functools.partial(
        _ce2d_kernel,
        ignore_index=ignore_index,
        # ignore_index outside [0, C) can never collide with a class id, so the
        # hit mask needs no & valid (saves one (C, T) compare+and per element).
        mask_hit_with_valid=(0 <= ignore_index < C),
    )

    # TODO(synk): per-class `weight` vector (module default weight=None) not implemented.
    loss_parts, cnt_parts = pl.pallas_call(
        kernel,
        out_shape=(jax.ShapeDtypeStruct((num_tiles, 1), jnp.float32),
                   jax.ShapeDtypeStruct((num_tiles, 1), jnp.int32)),
        grid=(num_tiles,),
        in_specs=[
            pl.BlockSpec((C, tile_n), lambda i: (0, i)),
            pl.BlockSpec((1, tile_n), lambda i: (0, i)),
        ],
        out_specs=(pl.BlockSpec((1, 1), lambda i: (i, 0)),
                   pl.BlockSpec((1, 1), lambda i: (i, 0))),
        compiler_params=pltpu.CompilerParams(
            dimension_semantics=("parallel",)),
    )(xt, t2)

    loss_sum = jnp.sum(loss_parts)                    # f32
    count = jnp.sum(cnt_parts)                        # exact int32 denominator
    return loss_sum / count.astype(jnp.float32)


def _reference(inputs, targets, ignore_index=255):
    # pure-JAX reference mirroring F.log_softmax(dim=1) + NLLLoss(ignore_index, mean)
    N, C = inputs.shape[0], inputs.shape[1]
    x = inputs.reshape(N, C).astype(jnp.float32)
    t = targets.reshape(N).astype(jnp.int32)
    logp = jax.nn.log_softmax(x, axis=-1)
    safe_t = jnp.where(t == ignore_index, 0, t)
    picked = jnp.take_along_axis(logp, safe_t[:, None], axis=-1)[:, 0]
    valid = (t != ignore_index).astype(jnp.float32)
    return jnp.sum(-picked * valid) / jnp.sum(valid)


if __name__ == "__main__":
    key = jax.random.PRNGKey(0)
    k1, k2, k3, k4 = jax.random.split(key, 4)

    # Case 1: tiny NCHW-with-trivial-spatial case, matching the module's forward.
    N, C = 8, 16
    inputs = jax.random.normal(k1, (N, C, 1, 1), dtype=jnp.float32)
    targets = jax.random.randint(k2, (N,), 0, C, dtype=jnp.int32)
    targets = targets.at[3].set(255)
    loss = jax.block_until_ready(cross_entropy_loss_2d(inputs, targets))
    ref = _reference(inputs, targets)
    assert jnp.allclose(loss, ref, atol=1e-5, rtol=1e-5), (loss, ref)

    # Case 2: f32, multi-tile grid + ragged (non-multiple-of-tile) N with some
    # extreme logits — exercises the no-pad ragged-last-block path exactly.
    N2, C2 = 300, 21
    x2 = jax.random.normal(k3, (N2, C2, 1, 1), dtype=jnp.float32)
    x2 = x2.at[::11].multiply(50.0)
    t2 = jax.random.randint(k4, (N2,), 0, C2, dtype=jnp.int32)
    t2 = t2.at[::7].set(255)
    loss2 = jax.block_until_ready(cross_entropy_loss_2d(x2, t2, tile_n=128))
    ref2 = _reference(x2, t2)
    assert jnp.allclose(loss2, ref2, atol=1e-5, rtol=1e-5), (loss2, ref2)

    # Case 3: bf16 logits path (no whole-block f32 cast; exp runs in bf16 on
    # v6e/v7x), so tolerance reflects bf16 transcendental precision.
    x3 = x2.astype(jnp.bfloat16)
    loss3 = jax.block_until_ready(cross_entropy_loss_2d(x3, t2, tile_n=128))
    ref3 = _reference(x3, t2)
    assert jnp.allclose(loss3, ref3, atol=2e-2, rtol=2e-2), (loss3, ref3)

    # Case 4: producer already emits class-major (C, N) -> no transpose copy.
    x4 = jnp.transpose(x2.reshape(N2, C2))            # (C, N)
    loss4 = jax.block_until_ready(
        cross_entropy_loss_2d(x4, t2, tile_n=128, class_major=True))
    assert jnp.allclose(loss4, loss2, atol=1e-6, rtol=1e-6), (loss4, loss2)

    print("KERNEL_OK")
</pallas_src>

<mosaic_0001>
module attributes {stable_mosaic.version = 11 : i64} {
  func.func @_ce2d_kernel(%arg0: i32, %arg1: memref<16x128xf32, #tpu.memory_space<vmem>>, %arg2: memref<1x128xi32, #tpu.memory_space<vmem>>, %arg3: memref<1x1xf32, #tpu.memory_space<vmem>>, %arg4: memref<1x1xi32, #tpu.memory_space<vmem>>) attributes {dimension_semantics = [#tpu.dimension_semantics<parallel>], iteration_bounds = array<i64: 1>, scalar_prefetch = 0 : i64, scratch_operands = 0 : i64, tpu.core_type = #tpu.core_type<tc>, window_params = [{transform_indices = @transform_0, window_bounds = array<i64: 16, 128>}, {transform_indices = @transform_1, window_bounds = array<i64: 1, 128>}, {transform_indices = @transform_2, window_bounds = array<i64: 1, 1>}, {transform_indices = @transform_3, window_bounds = array<i64: 1, 1>}]} {
    %c0 = arith.constant 0 : index
    %c0_0 = arith.constant 0 : index
    %0 = vector.load %arg1[%c0, %c0_0] : memref<16x128xf32, #tpu.memory_space<vmem>>, vector<16x128xf32>
    %c0_1 = arith.constant 0 : index
    %c0_2 = arith.constant 0 : index
    %1 = vector.load %arg2[%c0_1, %c0_2] : memref<1x128xi32, #tpu.memory_space<vmem>>, vector<1x128xi32>
    %cst = arith.constant dense<0xFF800000> : vector<128xf32>
    %2 = vector.multi_reduction <maximumf>, %0, %cst [0] : vector<16x128xf32> to vector<128xf32>
    %3 = vector.shape_cast %2 : vector<128xf32> to vector<1x128xf32>
    %4 = vector.broadcast %3 : vector<1x128xf32> to vector<16x128xf32>
    %5 = arith.subf %0, %4 : vector<16x128xf32>
    %6 = math.exp %5 : vector<16x128xf32>
    %cst_3 = arith.constant dense<0.000000e+00> : vector<128xf32>
    %7 = vector.multi_reduction <add>, %6, %cst_3 [0] : vector<16x128xf32> to vector<128xf32>
    %8 = vector.shape_cast %7 : vector<128xf32> to vector<1x128xf32>
    %9 = math.log %8 : vector<1x128xf32>
    %c255_i32 = arith.constant 255 : i32
    %10 = vector.broadcast %c255_i32 : i32 to vector<1x128xi32>
    %11 = arith.cmpi ne, %1, %10 : vector<1x128xi32>
    %12 = tpu.iota {dimensions = array<i32: 0>} : vector<16x128xi32>
    %13 = vector.broadcast %1 : vector<1x128xi32> to vector<16x128xi32>
    %14 = arith.cmpi eq, %12, %13 : vector<16x128xi32>
    %c0_i32 = arith.constant 0 : i32
    %15 = arith.sitofp %c0_i32 : i32 to f32
    %16 = vector.broadcast %15 : f32 to vector<16x128xf32>
    %17 = arith.select %14, %0, %16 : vector<16x128xi1>, vector<16x128xf32>
    %cst_4 = arith.constant dense<0.000000e+00> : vector<128xf32>
    %18 = vector.multi_reduction <add>, %17, %cst_4 [0] : vector<16x128xf32> to vector<128xf32>
    %19 = vector.shape_cast %18 : vector<128xf32> to vector<1x128xf32>
    %20 = arith.addf %9, %3 : vector<1x128xf32>
    %21 = arith.subf %20, %19 : vector<1x128xf32>
    %cst_5 = arith.constant 0.000000e+00 : f32
    %22 = vector.broadcast %cst_5 : f32 to vector<1x128xf32>
    %23 = arith.select %11, %21, %22 : vector<1x128xi1>, vector<1x128xf32>
    %cst_6 = arith.constant dense<0.000000e+00> : vector<1xf32>
    %24 = vector.multi_reduction <add>, %23, %cst_6 [1] : vector<1x128xf32> to vector<1xf32>
    %25 = vector.shape_cast %24 : vector<1xf32> to vector<1x1xf32>
    %c0_7 = arith.constant 0 : index
    %c0_8 = arith.constant 0 : index
    %26 = vector.load %arg3[%c0_7, %c0_8] : memref<1x1xf32, #tpu.memory_space<vmem>>, vector<1x1xf32>
    tpu.vector_store %arg3[%c0_7, %c0_8], %25 {strides = array<i32>} : memref<1x1xf32, #tpu.memory_space<vmem>>, vector<1x1xf32>,
    %27 = arith.extui %11 : vector<1x128xi1> to vector<1x128xi32>
    %cst_9 = arith.constant dense<0> : vector<1xi32>
    %28 = vector.multi_reduction <add>, %27, %cst_9 [1] : vector<1x128xi32> to vector<1xi32>
    %29 = vector.shape_cast %28 : vector<1xi32> to vector<1x1xi32>
    %c0_10 = arith.constant 0 : index
    %c0_11 = arith.constant 0 : index
    %30 = vector.load %arg4[%c0_10, %c0_11] : memref<1x1xi32, #tpu.memory_space<vmem>>, vector<1x1xi32>
    tpu.vector_store %arg4[%c0_10, %c0_11], %29 {strides = array<i32>} : memref<1x1xi32, #tpu.memory_space<vmem>>, vector<1x1xi32>,
    return
  }
  func.func @transform_0(%arg0: i32) -> (i32, i32) {
    %c0_i32 = arith.constant 0 : i32
    %c0_i32_0 = arith.constant 0 : i32
    return %c0_i32, %arg0 : i32, i32
  }
  func.func @transform_1(%arg0: i32) -> (i32, i32) {
    %c0_i32 = arith.constant 0 : i32
    %c0_i32_0 = arith.constant 0 : i32
    return %c0_i32, %arg0 : i32, i32
  }
  func.func @transform_2(%arg0: i32) -> (i32, i32) {
    %c0_i32 = arith.constant 0 : i32
    %c0_i32_0 = arith.constant 0 : i32
    return %arg0, %c0_i32 : i32, i32
  }
  func.func @transform_3(%arg0: i32) -> (i32, i32) {
    %c0_i32 = arith.constant 0 : i32
    %c0_i32_0 = arith.constant 0 : i32
    return %arg0, %c0_i32 : i32, i32
  }
}

</mosaic_0001>

<llo_original>
// kernel: tpu_custom_call.1
$region0: #{tpu_custom_call.1}
  #allocation0 [shape = 'u32[]', space=smem, size = 0x4, offset = 0x4, fixed_abs, tag = 'smem constant byte address 0x4 - core index']
  #allocation1 [shape = 'u32[144,128]{1,0:T(1,128)}', space=vmem, size = 0x12000, scoped, tag = 'internal scratch']
  %s0 = inlined_call_operand.vmem [shape: f32[16,8], index: 0, kind: input, shape index: {}]
  %s1 = inlined_call_operand.vmem [shape: s32[1,128], index: 1, kind: input, shape index: {}]
  %s2 = inlined_call_operand.hbm [shape: f32[1,1], index: 2, kind: output, shape index: {0}]
  %s3 = inlined_call_operand.hbm [shape: s32[1,1], index: 3, kind: output, shape index: {1}]
  %4 = xla_tuple %s2, %s3
  %s5 = sld [smem:[#allocation0]]
  $region26: #{tpu_custom_call.1} parent=0
    _
  %s7 = ssub.s32 1, %s5
  %s8 = scalar_select 0, %s7, %s5
  $region1: #{tpu_custom_call.1} parent=0
    #allocation2 [shape = 'u8[512]{0}', space=vmem, size = 0x400, scoped, tag = 'output window, operand 0, single buffered']
    #allocation3 [shape = 's32[1]{0}', space=sflag, size = 0x4, scoped, tag = 'scoped memory for tpu_custom_call.1']
    #allocation4 [shape = 'u8[512]{0}', space=vmem, size = 0x400, scoped, tag = 'output window, operand 1, single buffered']
    #allocation5 [shape = 's32[1]{0}', space=sflag, size = 0x4, scoped, tag = 'scoped memory for tpu_custom_call.1']
    %9 = vsyncpa [#allocation3], 0
    %10 = vsyncpa [#allocation5], 0
    // Predicated region
    $region2: #{tpu_custom_call.1} parent=1 // pred_check
      _
    $region3: #{tpu_custom_call.1} parent=1 // pred_check_branch
      %12 = sbr.rel (0) target = $region5
    $region4: #{tpu_custom_call.1} parent=1 // pred_region
      _
    $region5: #{tpu_custom_call.1} parent=1 // pred_fallthru
      _
    // Predicated region
    $region6: #{tpu_custom_call.1} parent=1 // pred_check
      _
    $region7: #{tpu_custom_call.1} parent=1 // pred_check_branch
      %14 = sbr.rel (0) target = $region9
    $region8: #{tpu_custom_call.1} parent=1 // pred_region
      _
    $region9: #{tpu_custom_call.1} parent=1 // pred_fallthru
      _
    %v15 = vld [vmem:[%s0] sm:$0xff]
    %v16 = vld [vmem:[%s0 + $0x8] sm:$0xff]
    %v17 = vld [vmem:[%s1] sm:$0x1]
    %v18 = vmax.f32 %v15, %v16
    %v19 = vrot.slane %v18, 4
    %v20 = vmax.f32 %v18, %v19
    %v21 = vrot.slane %v20, 2
    %v22 = vmax.f32 %v20, %v21
    %v23 = vrot.slane %v22, 1
    %v24 = vmax.f32 %v22, %v23
    %v25 = vsub.f32 %v15, %v24
    %v26 = vsub.f32 %v16, %v24
    %v27 = vmul.f32 %v25, 1.442695
    %v28 = vpow.pop %v27
    %v29 = vmul.f32 %v26, 1.442695
    %v30 = vpow.pop %v29
    %v31 = vadd.f32 %v28, %v30
    %v32 = vrot.slane %v31, 4
    %v33 = vadd.f32 %v31, %v32
    %v34 = vrot.slane %v33, 2
    %v35 = vadd.f32 %v33, %v34
    %v36 = vrot.slane %v35, 1
    %v37 = vadd.f32 %v35, %v36
    %v38 = vlog2.pop %v37
    %v39 = vmul.f32 %v38, 0.6931472
    %vm40 = vcmp.ne.s32.totalorder %v17, 255
    %v41 = vlaneseq
    %v42 = vshrl.u32 %v41, 7
    %v43 = vadd.s32 %v42, 8
    %v44 = vlaneseq
    %v45 = vshrl.u32 %v44, 7
    %v46 = vsub.s32 0, %v45
    %v47 = vrot.slane %v17, %v46
    %vm48 = vcmp.eq.s32.totalorder %v42, %v47
    %vm49 = vcmp.eq.s32.totalorder %v43, %v47
    %v50 = vsel %vm48, %v15, 0.0
    %v51 = vsel %vm49, %v16, 0.0
    %v52 = vadd.f32 %v50, %v51
    %v53 = vrot.slane %v52, 4
    %v54 = vadd.f32 %v52, %v53
    %v55 = vrot.slane %v54, 2
    %v56 = vadd.f32 %v54, %v55
    %v57 = vrot.slane %v56, 1
    %v58 = vadd.f32 %v56, %v57
    %v59 = vadd.f32 %v39, %v24
    %v60 = vsub.f32 %v59, %v58
    %v61 = vsel %vm40, %v60, 0.0
    %vm62 = vcmask 1040384
    %v63 = vsel %vm62, %v61, 0.0
    %64 = vadd.xlane.f32.xlu0 %v63
    %v65 = vpop.xlane.xlu0 %64
    %vm66 = vcmask 0
    %67 = vst.msk [vmem:[#allocation2] sm:$0x1] %vm66, %v65
    %v68 = vsel %vm40, 1, 0
    %v69 = vsel %vm62, %v68, 0
    %v70 = vand.u32 %v69, 65535
    %v71 = vshrl.u32 %v69, 16
    %v72 = vcvt.s32.f32 %v70
    %v73 = vcvt.s32.f32 %v71
    %74 = vadd.xlane.f32.xlu0 %v72
    %v75 = vpop.xlane.xlu0 %74
    %76 = vadd.xlane.f32.xlu0 %v73
    %v77 = vpop.xlane.xlu0 %76
    %v78 = vcvt.f32.s32 %v75
    %v79 = vcvt.f32.s32 %v77
    %v80 = vshll.u32 %v79, 16
    %v81 = vadd.s32 %v80, %v78
    %82 = vst.msk [vmem:[#allocation4] sm:$0x1] %vm66, %v81
    // Predicated region
    $region10: #{tpu_custom_call.1} parent=1 // pred_check
      _
    $region11: #{tpu_custom_call.1} parent=1 // pred_check_branch
      %84 = sbr.rel (0) target = $region13
    $region12: #{tpu_custom_call.1} parent=1 // pred_region
      %s86 = ssub.s32 16, 16
      %87 = vsyncadd [#allocation3], %s86
      %s89 = sshll.u32 [#allocation2], 4
      %s90 = int_to_ptr.vmem [resolvable:$true] %s89
      %92 = dma.vmem_to_hbm [thread:$0]  %s90, 16, %s2, [#allocation3]
    $region13: #{tpu_custom_call.1} parent=1 // pred_fallthru
      _
    // Predicated region
    $region14: #{tpu_custom_call.1} parent=1 // pred_check
      _
    $region15: #{tpu_custom_call.1} parent=1 // pred_check_branch
      %94 = sbr.rel (0) target = $region17
    $region16: #{tpu_custom_call.1} parent=1 // pred_region
      %s96 = ssub.s32 16, 16
      %97 = vsyncadd [#allocation5], %s96
      %s99 = sshll.u32 [#allocation4], 4
      %s100 = int_to_ptr.vmem [resolvable:$true] %s99
      %102 = dma.vmem_to_hbm [thread:$0]  %s100, 16, %s3, [#allocation5]
    $region17: #{tpu_custom_call.1} parent=1 // pred_fallthru
      _
    // Predicated region
    $region18: #{tpu_custom_call.1} parent=1 // pred_check
      _
    $region19: #{tpu_custom_call.1} parent=1 // pred_check_branch
      %104 = sbr.rel (0) target = $region21
    $region20: #{tpu_custom_call.1} parent=1 // pred_region
      %105 = dma.done [#allocation3], 16
    $region21: #{tpu_custom_call.1} parent=1 // pred_fallthru
      _
    // Predicated region
    $region22: #{tpu_custom_call.1} parent=1 // pred_check
      _
    $region23: #{tpu_custom_call.1} parent=1 // pred_check_branch
      %107 = sbr.rel (0) target = $region25
    $region24: #{tpu_custom_call.1} parent=1 // pred_region
      %108 = dma.done [#allocation5], 16
    $region25: #{tpu_custom_call.1} parent=1 // pred_fallthru
      _
    %109 = vsyncpa [#allocation3], 1
    %110 = vsyncpa [#allocation5], 1

</llo_original>
